<compile_context>
chip_gen: v7x
topology: tpu7x:2x2x1
jax: 0.10.0
libtpu: 0.0.40
codegen_flags: <defaults>
</compile_context>

<pallas_src>
import functools

import jax
import jax.numpy as jnp
import numpy as np
from jax.experimental import pallas as pl
from jax.experimental.pallas import tpu as pltpu


def _self_attention_kernel(x_ref, w1_ref, b1_ref, w2r_ref, b2_ref,
                           ctx_ref, wts_ref, *, t_valid):
    """One grid step processes a block of Bb batch rows.

    x_ref:   (Bb, T, H) VMEM, storage dtype (f32 or bf16)
    w1_ref:  (H, A)     VMEM, same dtype as x (replicated across the grid)
    b1_ref:  (1, A)     VMEM, f32
    w2r_ref: (1, A)     VMEM, f32 (second Linear's weight as a row vector)
    b2_ref:  (1, 1)     VMEM, f32
    ctx_ref: (Bb, H)    VMEM, f32
    wts_ref: (Bb, T)    VMEM, f32 (lane-dense: T on the lane axis)
    """
    Bb, T, H = x_ref.shape
    A = w1_ref.shape[1]

    # Consume x in its storage dtype -- no whole-tile upcast copy.
    x = x_ref[...]                                               # (Bb, T, H)

    # ---- Linear(H, A) + ReLU: one big MXU matmul over all Bb*T rows --------
    # T is padded in the wrapper so this reshape is a sublane-merge no-op.
    x2 = x.reshape(Bb * T, H)
    h = jnp.dot(x2, w1_ref[...],
                preferred_element_type=jnp.float32) + b1_ref[...]
    h = jnp.maximum(h, 0.0)                                      # (Bb*T, A) f32

    # ---- Linear(A, 1): VPU multiply + lane reduce (no lane-1 MXU matmul) ---
    h3 = h.reshape(Bb, T, A)
    s = jnp.sum(h3 * w2r_ref[...], axis=-1) + b2_ref[...]        # (Bb, T) f32

    # Mask padded time steps (kept out of the softmax; matches masked_fill).
    if t_valid < T:
        t_idx = jax.lax.broadcasted_iota(jnp.int32, (Bb, T), 1)
        s = jnp.where(t_idx < t_valid, s, -1e9)

    # ---- softmax over the sequence (lane) axis ------------------------------
    m = jnp.max(s, axis=-1, keepdims=True)                       # (Bb, 1)
    e = jnp.exp(s - m)
    denom = jnp.sum(e, axis=-1, keepdims=True)                   # (Bb, 1)
    inv = pl.reciprocal(denom, approx=True)                      # EUP slot
    inv = inv * (2.0 - denom * inv)                              # Newton step
    w = e * inv                                                  # (Bb, T) f32

    wts_ref[...] = w.astype(wts_ref.dtype)

    # ---- context = sum_t w[b,t] * x[b,t,:] ----------------------------------
    # Batched matvec on the MXU (M=1). If the MXU slot binds at deployment
    # shapes, benchmark against the VPU/XLU route:
    #   jnp.sum(w[..., None].astype(x.dtype) * x, axis=1)
    wq = w.astype(x.dtype).reshape(Bb, 1, T)
    ctx3 = jnp.einsum("bqt,bth->bqh", wq, x,
                      preferred_element_type=jnp.float32)        # (Bb, 1, H)
    ctx_ref[...] = ctx3.reshape(Bb, H).astype(ctx_ref.dtype)


def _round_up(n, m):
    return -(-n // m) * m


def _vmem_capacity_bytes():
    try:
        return int(pltpu.get_tpu_info().vmem_capacity_bytes)
    except Exception:
        return 64 << 20  # conservative: v7x per-TensorCore capacity


def self_attention(x, w1, b1, w2, b2, *, b_blk=None):
    """x: (B, T, H), f32 or bf16. Returns (context (B, H) f32, weights (B, T, 1) f32)."""
    B, T, H = x.shape
    A = w1.shape[1]

    x_item = x.dtype.itemsize
    out_item = 4  # f32 outputs (accumulation is f32 anyway)

    # Pad T to the sublane granularity so in-kernel reshapes are layout no-ops.
    sub = 8 if x_item == 4 else 16
    T_pad = _round_up(T, sub)

    # ---- VMEM-derived batch-block size (BlockSpec double-buffers => 2x) ----
    per_row = 2 * (T_pad * H * x_item) + 2 * (H + T_pad) * out_item
    fixed = 2 * (H * A * x_item + (2 * A + 1) * 4)
    cap = _vmem_capacity_bytes()           # 128 MiB v5e/v6e, 64 MiB v7x
    budget = cap // 4                      # headroom for compiler scratch/spills
    if b_blk is None:
        b_blk = max(8, ((budget - fixed) // per_row) // 8 * 8)
        # Keep >= 2 grid steps so the pipeline can prefetch the next block and
        # both v7x TensorCores get a share of the "parallel" batch axis.
        b_blk = min(b_blk, max(8, _round_up((B + 1) // 2, 8)))
    nb = max(2, pl.cdiv(B, b_blk))
    B_pad = nb * b_blk

    if (B_pad, T_pad) != (B, T):
        x = jnp.pad(x, ((0, B_pad - B), (0, T_pad - T), (0, 0)))

    w1 = w1.astype(x.dtype)                # MXU input dtype follows x (bf16 ok)
    b1_2d = b1.reshape(1, A).astype(jnp.float32)
    w2_row = w2.reshape(1, A).astype(jnp.float32)   # (A, 1) column -> (1, A) row
    b2_2d = b2.reshape(1, 1).astype(jnp.float32)

    cost = pl.CostEstimate(
        flops=int(2 * B_pad * T_pad * H * A
                  + 3 * B_pad * T_pad * A
                  + 2 * B_pad * T_pad * H),
        transcendentals=int(B_pad * T_pad + B_pad),
        bytes_accessed=int(B_pad * T_pad * H * x_item + H * A * x_item
                           + B_pad * (H + T_pad) * out_item),
    )

    needed = fixed + per_row * b_blk
    vmem_limit = int(min(cap // 2, max(needed + needed // 4, 16 << 20)))

    kernel = functools.partial(_self_attention_kernel, t_valid=T)

    ctx, wts = pl.pallas_call(
        kernel,
        out_shape=(
            jax.ShapeDtypeStruct((B_pad, H), jnp.float32),
            jax.ShapeDtypeStruct((B_pad, T_pad), jnp.float32),
        ),
        grid_spec=pltpu.PrefetchScalarGridSpec(
            num_scalar_prefetch=0,
            grid=(nb,),
            in_specs=[
                pl.BlockSpec((b_blk, T_pad, H), lambda b: (b, 0, 0)),  # x block
                pl.BlockSpec((H, A), lambda b: (0, 0)),                # W1
                pl.BlockSpec((1, A), lambda b: (0, 0)),                # b1
                pl.BlockSpec((1, A), lambda b: (0, 0)),                # W2 row
                pl.BlockSpec((1, 1), lambda b: (0, 0)),                # b2
            ],
            out_specs=[
                pl.BlockSpec((b_blk, H), lambda b: (b, 0)),            # context
                pl.BlockSpec((b_blk, T_pad), lambda b: (b, 0)),        # weights
            ],
        ),
        compiler_params=pltpu.CompilerParams(
            dimension_semantics=("parallel",),
            vmem_limit_bytes=vmem_limit),
        cost_estimate=cost,
    )(x, w1, b1_2d, w2_row, b2_2d)

    ctx = ctx[:B]
    wts = wts[:B, :T].reshape(B, T, 1)     # match PyTorch (B, T, 1) layout
    return ctx, wts


def _reference(x, w1, b1, w2, b2):
    h = jnp.maximum(jnp.einsum("bth,ha->bta", x, w1) + b1, 0.0)
    s = jnp.einsum("bta,ao->bto", h, w2) + b2                    # (B, T, 1)
    w = jax.nn.softmax(s, axis=1)
    ctx = jnp.sum(w * x, axis=1)
    return ctx, w


if __name__ == "__main__":
    # Shapes implied by the module: x (B, T, hidden_dim); attention_dim = hidden_dim // 2
    B, T, H = 2, 8, 32
    A = H // 2

    key = jax.random.PRNGKey(0)
    kx, k1, kb1, k2, kb2 = jax.random.split(key, 5)

    x = jax.random.normal(kx, (B, T, H), dtype=jnp.float32)
    # nn.Linear weights stored transposed relative to PyTorch: W1 (H, A), W2 (A, 1).
    w1 = jax.random.normal(k1, (H, A), dtype=jnp.float32) * 0.1
    b1 = jax.random.normal(kb1, (A,), dtype=jnp.float32) * 0.1
    w2 = jax.random.normal(k2, (A, 1), dtype=jnp.float32) * 0.1
    b2 = jax.random.normal(kb2, (1,), dtype=jnp.float32) * 0.1

    # f32 path: matches the f32 PyTorch module numerics.
    ctx, wts = self_attention(x, w1, b1, w2, b2)
    ctx, wts = jax.block_until_ready(ctx), jax.block_until_ready(wts)
    ctx_ref, wts_ref = _reference(x, w1, b1, w2, b2)
    assert np.allclose(np.asarray(ctx), np.asarray(ctx_ref), atol=1e-4, rtol=1e-4)
    assert np.allclose(np.asarray(wts), np.asarray(wts_ref), atol=1e-4, rtol=1e-4)

    # bf16 streaming path (deployment mode: halves HBM traffic, f32 accumulate).
    xb = x.astype(jnp.bfloat16)
    ctx_b, wts_b = self_attention(xb, w1, b1, w2, b2)
    ctx_b, wts_b = jax.block_until_ready(ctx_b), jax.block_until_ready(wts_b)
    ctx_rb, wts_rb = _reference(xb.astype(jnp.float32), w1, b1, w2, b2)
    assert np.allclose(np.asarray(ctx_b), np.asarray(ctx_rb), atol=2e-2, rtol=2e-2)
    assert np.allclose(np.asarray(wts_b), np.asarray(wts_rb), atol=2e-2, rtol=2e-2)

    print("KERNEL_OK")
</pallas_src>

<mosaic_0001>
module attributes {stable_mosaic.version = 11 : i64} {
  func.func @_self_attention_kernel(%arg0: i32, %arg1: memref<8x8x32xf32, #tpu.memory_space<vmem>>, %arg2: memref<32x16xf32, #tpu.memory_space<vmem>>, %arg3: memref<1x16xf32, #tpu.memory_space<vmem>>, %arg4: memref<1x16xf32, #tpu.memory_space<vmem>>, %arg5: memref<1x1xf32, #tpu.memory_space<vmem>>, %arg6: memref<8x32xf32, #tpu.memory_space<vmem>>, %arg7: memref<8x8xf32, #tpu.memory_space<vmem>>) attributes {dimension_semantics = [#tpu.dimension_semantics<parallel>], iteration_bounds = array<i64: 2>, scalar_prefetch = 0 : i64, scratch_operands = 0 : i64, tpu.core_type = #tpu.core_type<tc>, window_params = [{transform_indices = @transform_0, window_bounds = array<i64: 8, 8, 32>}, {pipeline_mode = #tpu.pipeline_mode<synchronous>, transform_indices = @transform_1, window_bounds = array<i64: 32, 16>}, {pipeline_mode = #tpu.pipeline_mode<synchronous>, transform_indices = @transform_2, window_bounds = array<i64: 1, 16>}, {pipeline_mode = #tpu.pipeline_mode<synchronous>, transform_indices = @transform_3, window_bounds = array<i64: 1, 16>}, {pipeline_mode = #tpu.pipeline_mode<synchronous>, transform_indices = @transform_4, window_bounds = array<i64: 1, 1>}, {transform_indices = @transform_5, window_bounds = array<i64: 8, 32>}, {transform_indices = @transform_6, window_bounds = array<i64: 8, 8>}]} {
    %c0 = arith.constant 0 : index
    %c0_0 = arith.constant 0 : index
    %c0_1 = arith.constant 0 : index
    %0 = vector.load %arg1[%c0, %c0_0, %c0_1] : memref<8x8x32xf32, #tpu.memory_space<vmem>>, vector<8x8x32xf32>
    %1 = vector.shape_cast %0 : vector<8x8x32xf32> to vector<64x32xf32>
    %c0_2 = arith.constant 0 : index
    %c0_3 = arith.constant 0 : index
    %2 = vector.load %arg2[%c0_2, %c0_3] : memref<32x16xf32, #tpu.memory_space<vmem>>, vector<32x16xf32>
    %cst = arith.constant dense<0.000000e+00> : vector<64x16xf32>
    %3 = tpu.matmul %1, %2, %cst {dimension_numbers = #tpu.dot_dimension_numbers<[1], [0], [0], [1], [0, 0, 1, 1], [], []>} : vector<64x32xf32>, vector<32x16xf32>, vector<64x16xf32> -> vector<64x16xf32>
    %c0_4 = arith.constant 0 : index
    %c0_5 = arith.constant 0 : index
    %4 = vector.load %arg3[%c0_4, %c0_5] : memref<1x16xf32, #tpu.memory_space<vmem>>, vector<1x16xf32>
    %5 = vector.broadcast %4 : vector<1x16xf32> to vector<64x16xf32>
    %6 = arith.addf %3, %5 : vector<64x16xf32>
    %cst_6 = arith.constant 0.000000e+00 : f32
    %7 = vector.broadcast %cst_6 : f32 to vector<64x16xf32>
    %8 = arith.maximumf %6, %7 : vector<64x16xf32>
    %9 = vector.shape_cast %8 : vector<64x16xf32> to vector<8x8x16xf32>
    %c0_7 = arith.constant 0 : index
    %c0_8 = arith.constant 0 : index
    %10 = vector.load %arg4[%c0_7, %c0_8] : memref<1x16xf32, #tpu.memory_space<vmem>>, vector<1x16xf32>
    %11 = vector.shape_cast %10 : vector<1x16xf32> to vector<1x1x16xf32>
    %12 = vector.broadcast %11 : vector<1x1x16xf32> to vector<8x8x16xf32>
    %13 = arith.mulf %9, %12 : vector<8x8x16xf32>
    %cst_9 = arith.constant dense<0.000000e+00> : vector<8x8xf32>
    %14 = vector.multi_reduction <add>, %13, %cst_9 [2] : vector<8x8x16xf32> to vector<8x8xf32>
    %c0_10 = arith.constant 0 : index
    %c0_11 = arith.constant 0 : index
    %15 = vector.load %arg5[%c0_10, %c0_11] : memref<1x1xf32, #tpu.memory_space<vmem>>, vector<1x1xf32>
    %16 = vector.broadcast %15 : vector<1x1xf32> to vector<8x8xf32>
    %17 = arith.addf %14, %16 : vector<8x8xf32>
    %cst_12 = arith.constant dense<0xFF800000> : vector<8xf32>
    %18 = vector.multi_reduction <maximumf>, %17, %cst_12 [1] : vector<8x8xf32> to vector<8xf32>
    %19 = vector.shape_cast %18 : vector<8xf32> to vector<8x1xf32>
    %20 = vector.broadcast %19 : vector<8x1xf32> to vector<8x8xf32>
    %21 = arith.subf %17, %20 : vector<8x8xf32>
    %22 = math.exp %21 : vector<8x8xf32>
    %cst_13 = arith.constant dense<0.000000e+00> : vector<8xf32>
    %23 = vector.multi_reduction <add>, %22, %cst_13 [1] : vector<8x8xf32> to vector<8xf32>
    %24 = vector.shape_cast %23 : vector<8xf32> to vector<8x1xf32>
    %25 = tpu.reciprocal %24 {approx = true} : vector<8x1xf32> -> vector<8x1xf32>
    %26 = arith.mulf %24, %25 : vector<8x1xf32>
    %cst_14 = arith.constant 2.000000e+00 : f32
    %27 = vector.broadcast %cst_14 : f32 to vector<8x1xf32>
    %28 = arith.subf %27, %26 : vector<8x1xf32>
    %29 = arith.mulf %25, %28 : vector<8x1xf32>
    %30 = vector.broadcast %29 : vector<8x1xf32> to vector<8x8xf32>
    %31 = arith.mulf %22, %30 : vector<8x8xf32>
    %c0_15 = arith.constant 0 : index
    %c0_16 = arith.constant 0 : index
    %32 = vector.load %arg7[%c0_15, %c0_16] : memref<8x8xf32, #tpu.memory_space<vmem>>, vector<8x8xf32>
    tpu.vector_store %arg7[%c0_15, %c0_16], %31 {strides = array<i32>} : memref<8x8xf32, #tpu.memory_space<vmem>>, vector<8x8xf32>,
    %33 = vector.shape_cast %31 : vector<8x8xf32> to vector<8x1x8xf32>
    "tpu.trace_start"() <{level = 10 : i32, message = "bqt,bth->bqh"}> : () -> ()
    %cst_17 = arith.constant dense<0.000000e+00> : vector<8x1x32xf32>
    %34 = tpu.matmul %33, %0, %cst_17 {dimension_numbers = #tpu.dot_dimension_numbers<[2], [1], [1], [2], [0, 0, 0, 1, 1, 2], [0], [0]>} : vector<8x1x8xf32>, vector<8x8x32xf32>, vector<8x1x32xf32> -> vector<8x1x32xf32>
    "tpu.trace_stop"() : () -> ()
    %35 = vector.shape_cast %34 : vector<8x1x32xf32> to vector<8x32xf32>
    %c0_18 = arith.constant 0 : index
    %c0_19 = arith.constant 0 : index
    %36 = vector.load %arg6[%c0_18, %c0_19] : memref<8x32xf32, #tpu.memory_space<vmem>>, vector<8x32xf32>
    tpu.vector_store %arg6[%c0_18, %c0_19], %35 {strides = array<i32>} : memref<8x32xf32, #tpu.memory_space<vmem>>, vector<8x32xf32>,
    return
  }
  func.func @transform_0(%arg0: i32) -> (i32, i32, i32) {
    %c0_i32 = arith.constant 0 : i32
    %c0_i32_0 = arith.constant 0 : i32
    %c0_i32_1 = arith.constant 0 : i32
    return %arg0, %c0_i32, %c0_i32_0 : i32, i32, i32
  }
  func.func @transform_1(%arg0: i32) -> (i32, i32) {
    %c0_i32 = arith.constant 0 : i32
    %c0_i32_0 = arith.constant 0 : i32
    %c0_i32_1 = arith.constant 0 : i32
    return %c0_i32, %c0_i32_0 : i32, i32
  }
  func.func @transform_2(%arg0: i32) -> (i32, i32) {
    %c0_i32 = arith.constant 0 : i32
    %c0_i32_0 = arith.constant 0 : i32
    %c0_i32_1 = arith.constant 0 : i32
    return %c0_i32, %c0_i32_0 : i32, i32
  }
  func.func @transform_3(%arg0: i32) -> (i32, i32) {
    %c0_i32 = arith.constant 0 : i32
    %c0_i32_0 = arith.constant 0 : i32
    %c0_i32_1 = arith.constant 0 : i32
    return %c0_i32, %c0_i32_0 : i32, i32
  }
  func.func @transform_4(%arg0: i32) -> (i32, i32) {
    %c0_i32 = arith.constant 0 : i32
    %c0_i32_0 = arith.constant 0 : i32
    %c0_i32_1 = arith.constant 0 : i32
    return %c0_i32, %c0_i32_0 : i32, i32
  }
  func.func @transform_5(%arg0: i32) -> (i32, i32) {
    %c0_i32 = arith.constant 0 : i32
    %c0_i32_0 = arith.constant 0 : i32
    return %arg0, %c0_i32 : i32, i32
  }
  func.func @transform_6(%arg0: i32) -> (i32, i32) {
    %c0_i32 = arith.constant 0 : i32
    %c0_i32_0 = arith.constant 0 : i32
    return %arg0, %c0_i32 : i32, i32
  }
}

</mosaic_0001>

<llo_original>
// kernel: tpu_custom_call.1
$region0: #{tpu_custom_call.1}
  #allocation0 [shape = 'u32[]', space=smem, size = 0x4, offset = 0x4, fixed_abs, tag = 'smem constant byte address 0x4 - core index']
  #allocation1 [shape = 'u32[144,128]{1,0:T(1,128)}', space=vmem, size = 0x12000, scoped, tag = 'internal scratch']
  #allocation2 [shape = 'f32[1,1]{1,0:T(1,128)S(1)}', space=vmem, size = 0x200, scoped, tag = 'scoped memory for tpu_custom_call.1']
  %s0 = inlined_call_operand.hbm [shape: f32[16,8,32], index: 0, kind: input, shape index: {}]
  %s1 = inlined_call_operand.vmem [shape: f32[32,16], index: 1, kind: input, shape index: {}]
  %s2 = inlined_call_operand.vmem [shape: f32[1,16], index: 2, kind: input, shape index: {}]
  %s3 = inlined_call_operand.vmem [shape: f32[1,16], index: 3, kind: input, shape index: {}]
  %s4 = inlined_call_operand.<no memory space> [shape: f32[1,1], index: 4, kind: input, shape index: {}]
  %s5 = inlined_call_operand.hbm [shape: f32[16,32], index: 5, kind: output, shape index: {0}]
  %s6 = inlined_call_operand.vmem [shape: f32[16,8], index: 6, kind: output, shape index: {1}]
  %7 = xla_tuple %s5, %s6
  %s8 = sld [smem:[#allocation0]]
  $region65: #{tpu_custom_call.1} parent=0
    _
  %s10 = ssub.s32 1, %s8
  %s11 = scalar_select 0, %s10, %s8
  %v12 = vstv %s4
  %13 = vst [vmem:[#allocation2] sm:$0x1] %v12
  $region1: #{tpu_custom_call.1} parent=0
    #allocation3 [shape = 'u8[65536]{0}', space=vmem, size = 0x10000, scoped, tag = 'input window, operand 0']
    #allocation4 [shape = 's32[2]{0}', space=sflag, size = 0x8, scoped, tag = 'scoped memory for tpu_custom_call.1']
    #allocation5 [shape = 's32[2]{0}', space=sflag, size = 0x8, scoped, tag = 'scoped memory for tpu_custom_call.1']
    #allocation6 [shape = 'u8[8192]{0}', space=vmem, size = 0x2000, scoped, tag = 'output window, operand 0']
    %14 = vsyncpa [#allocation4], 0
    %s15 = scalar_lea.sflag [#allocation4], 1
    %16 = vsyncpa %s15, 0
    %17 = vsyncpa [#allocation5], 0
    %s18 = scalar_lea.sflag [#allocation5], 1
    %19 = vsyncpa %s18, 0
    loop: start=0, step=1, limit=4
    $region2: #{tpu_custom_call.1} parent=1 // loop_pre_header
      _
    $region3: #{tpu_custom_call.1} parent=1 // loop_header
      %s21 = sphi 0, %s25
      %p22 = scmp.ge.s32.totalorder %s21, 4
      %s31 = sphi 0, %s33
      %s34 = sphi 0, %s31
      %s35 = sphi 0, %s34
      %s51 = sphi 0, %s35
      %s55 = sphi 0, %s55
      %s57 = sphi 0, %s55
      %s58 = sphi 0, %s57
      %s72 = sphi 0, %s58
      %s76 = sphi 0, %s76
      %s78 = sphi 0, %s76
      %s79 = sphi 0, %s78
      %s93 = sphi 0, %s79
      %s97 = sphi 0, %s97
      %s99 = sphi 0, %s97
      %s100 = sphi 0, %s99
      %s114 = sphi 0, %s100
      %s118 = sphi 0, %s118
      %s120 = sphi 0, %s118
      %s121 = sphi 0, %s120
      %s135 = sphi 0, %s121
      %s141 = sphi 0, %s143
      %s144 = sphi 0, %s141
      %s145 = sphi 0, %s144
      %s161 = sphi 0, %s145
      %s167 = sphi 0, %s169
      %s170 = sphi 0, %s167
      %s171 = sphi 0, %s170
      %s187 = sphi 0, %s171
    $region4: #{tpu_custom_call.1} parent=1 // loop_header_branch
      %24 = sbr.rel (%p22) target = $region8
    $region5: #{tpu_custom_call.1} parent=1 // loop_body
      %s26 = ssub.s32 %s21, 1
      %s27 = ssub.s32 %s21, 2
      %s28 = sadd.s32 %s21, 1
      %s29 = ssub.s32 %s21, %s28
      %p30 = scmp.eq.s32.totalorder %s29, 0
      %s32 = sadd.s32 %s31, 1
      %s33 = scalar_select %p30, %s31, %s32
      %p36 = pneg %p30
      %p37 = scmp.eq.s32.totalorder %s21, 1
      %p38 = por %p36, %p37
      %p39 = scmp.ne.s32.totalorder %s31, %s34
      %p40 = scmp.eq.s32.totalorder %s21, 0
      %p41 = por %p39, %p40
      %p42 = scmp.ne.s32.totalorder %s31, %s34
      %p43 = scmp.eq.s32.totalorder %s26, 1
      %p44 = por %p42, %p43
      %p45 = scmp.ne.s32.totalorder %s34, %s35
      %p46 = scmp.eq.s32.totalorder %s26, 0
      %p47 = por %p45, %p46
      %p48 = scmp.ne.s32.totalorder %s34, %s35
      %p49 = scmp.eq.s32.totalorder %s27, 1
      %p50 = por %p48, %p49
      %p52 = scmp.ne.s32.totalorder %s35, %s51
      %p53 = scmp.eq.s32.totalorder %s27, 0
      %p54 = por %p52, %p53
      %s56 = sadd.s32 %s55, 1
      %p59 = scmp.eq.s32.totalorder %s21, 1
      %p60 = scmp.ne.s32.totalorder %s55, %s57
      %p61 = scmp.eq.s32.totalorder %s21, 0
      %p62 = por %p60, %p61
      %p63 = scmp.ne.s32.totalorder %s55, %s57
      %p64 = scmp.eq.s32.totalorder %s26, 1
      %p65 = por %p63, %p64
      %p66 = scmp.ne.s32.totalorder %s57, %s58
      %p67 = scmp.eq.s32.totalorder %s26, 0
      %p68 = por %p66, %p67
      %p69 = scmp.ne.s32.totalorder %s57, %s58
      %p70 = scmp.eq.s32.totalorder %s27, 1
      %p71 = por %p69, %p70
      %p73 = scmp.ne.s32.totalorder %s58, %s72
      %p74 = scmp.eq.s32.totalorder %s27, 0
      %p75 = por %p73, %p74
      %s77 = sadd.s32 %s76, 1
      %p80 = scmp.eq.s32.totalorder %s21, 1
      %p81 = scmp.ne.s32.totalorder %s76, %s78
      %p82 = scmp.eq.s32.totalorder %s21, 0
      %p83 = por %p81, %p82
      %p84 = scmp.ne.s32.totalorder %s76, %s78
      %p85 = scmp.eq.s32.totalorder %s26, 1
      %p86 = por %p84, %p85
      %p87 = scmp.ne.s32.totalorder %s78, %s79
      %p88 = scmp.eq.s32.totalorder %s26, 0
      %p89 = por %p87, %p88
      %p90 = scmp.ne.s32.totalorder %s78, %s79
      %p91 = scmp.eq.s32.totalorder %s27, 1
      %p92 = por %p90, %p91
      %p94 = scmp.ne.s32.totalorder %s79, %s93
      %p95 = scmp.eq.s32.totalorder %s27, 0
      %p96 = por %p94, %p95
      %s98 = sadd.s32 %s97, 1
      %p101 = scmp.eq.s32.totalorder %s21, 1
      %p102 = scmp.ne.s32.totalorder %s97, %s99
      %p103 = scmp.eq.s32.totalorder %s21, 0
      %p104 = por %p102, %p103
      %p105 = scmp.ne.s32.totalorder %s97, %s99
      %p106 = scmp.eq.s32.totalorder %s26, 1
      %p107 = por %p105, %p106
      %p108 = scmp.ne.s32.totalorder %s99, %s100
      %p109 = scmp.eq.s32.totalorder %s26, 0
      %p110 = por %p108, %p109
      %p111 = scmp.ne.s32.totalorder %s99, %s100
      %p112 = scmp.eq.s32.totalorder %s27, 1
      %p113 = por %p111, %p112
      %p115 = scmp.ne.s32.totalorder %s100, %s114
      %p116 = scmp.eq.s32.totalorder %s27, 0
      %p117 = por %p115, %p116
      %s119 = sadd.s32 %s118, 1
      %p122 = scmp.eq.s32.totalorder %s21, 1
      %p123 = scmp.ne.s32.totalorder %s118, %s120
      %p124 = scmp.eq.s32.totalorder %s21, 0
      %p125 = por %p123, %p124
      %p126 = scmp.ne.s32.totalorder %s118, %s120
      %p127 = scmp.eq.s32.totalorder %s26, 1
      %p128 = por %p126, %p127
      %p129 = scmp.ne.s32.totalorder %s120, %s121
      %p130 = scmp.eq.s32.totalorder %s26, 0
      %p131 = por %p129, %p130
      %p132 = scmp.ne.s32.totalorder %s120, %s121
      %p133 = scmp.eq.s32.totalorder %s27, 1
      %p134 = por %p132, %p133
      %p136 = scmp.ne.s32.totalorder %s121, %s135
      %p137 = scmp.eq.s32.totalorder %s27, 0
      %p138 = por %p136, %p137
      %s139 = ssub.s32 %s21, %s28
      %p140 = scmp.eq.s32.totalorder %s139, 0
      %s142 = sadd.s32 %s141, 1
      %s143 = scalar_select %p140, %s141, %s142
      %p146 = pneg %p140
      %p147 = scmp.eq.s32.totalorder %s21, 1
      %p148 = por %p146, %p147
      %p149 = scmp.ne.s32.totalorder %s141, %s144
      %p150 = scmp.eq.s32.totalorder %s21, 0
      %p151 = por %p149, %p150
      %p152 = scmp.ne.s32.totalorder %s141, %s144
      %p153 = scmp.eq.s32.totalorder %s26, 1
      %p154 = por %p152, %p153
      %p155 = scmp.ne.s32.totalorder %s144, %s145
      %p156 = scmp.eq.s32.totalorder %s26, 0
      %p157 = por %p155, %p156
      %p158 = scmp.ne.s32.totalorder %s144, %s145
      %p159 = scmp.eq.s32.totalorder %s27, 1
      %p160 = por %p158, %p159
      %p162 = scmp.ne.s32.totalorder %s145, %s161
      %p163 = scmp.eq.s32.totalorder %s27, 0
      %p164 = por %p162, %p163
      %s165 = ssub.s32 %s21, %s28
      %p166 = scmp.eq.s32.totalorder %s165, 0
      %s168 = sadd.s32 %s167, 1
      %s169 = scalar_select %p166, %s167, %s168
      %p172 = pneg %p166
      %p173 = scmp.eq.s32.totalorder %s21, 1
      %p174 = por %p172, %p173
      %p175 = scmp.ne.s32.totalorder %s167, %s170
      %p176 = scmp.eq.s32.totalorder %s21, 0
      %p177 = por %p175, %p176
      %p178 = scmp.ne.s32.totalorder %s167, %s170
      %p179 = scmp.eq.s32.totalorder %s26, 1
      %p180 = por %p178, %p179
      %p181 = scmp.ne.s32.totalorder %s170, %s171
      %p182 = scmp.eq.s32.totalorder %s26, 0
      %p183 = por %p181, %p182
      %p184 = scmp.ne.s32.totalorder %s170, %s171
      %p185 = scmp.eq.s32.totalorder %s27, 1
      %p186 = por %p184, %p185
      %p188 = scmp.ne.s32.totalorder %s171, %s187
      %p189 = scmp.eq.s32.totalorder %s27, 0
      %p190 = por %p188, %p189
      %p191 = scmp.le.s32.totalorder 1, %s21
      %p192 = scmp.lt.s32.totalorder %s21, 3
      %p193 = pnand %p191, %p192
      %p194 = pneg %p193
      // Predicated region
      $region9: #{tpu_custom_call.1} parent=5 // pred_check
        _
      $region10: #{tpu_custom_call.1} parent=5 // pred_check_branch
        %196 = sbr.rel (%p193) target = $region12
      $region11: #{tpu_custom_call.1} parent=5 // pred_region
        %s197 = ssub.s32 %s21, 1
        // Predicated region
        $region13: #{tpu_custom_call.1} parent=11 // pred_check
          %p198 = pneg %p68
        $region14: #{tpu_custom_call.1} parent=11 // pred_check_branch
          %200 = sbr.rel (%p198) target = $region16
        $region15: #{tpu_custom_call.1} parent=11 // pred_region
          _
        $region16: #{tpu_custom_call.1} parent=11 // pred_fallthru
          _
        // Predicated region
        $region17: #{tpu_custom_call.1} parent=11 // pred_check
          %p201 = pneg %p89
        $region18: #{tpu_custom_call.1} parent=11 // pred_check_branch
          %203 = sbr.rel (%p201) target = $region20
        $region19: #{tpu_custom_call.1} parent=11 // pred_region
          _
        $region20: #{tpu_custom_call.1} parent=11 // pred_fallthru
          _
        // Predicated region
        $region21: #{tpu_custom_call.1} parent=11 // pred_check
          %p204 = pneg %p110
        $region22: #{tpu_custom_call.1} parent=11 // pred_check_branch
          %206 = sbr.rel (%p204) target = $region24
        $region23: #{tpu_custom_call.1} parent=11 // pred_region
          _
        $region24: #{tpu_custom_call.1} parent=11 // pred_fallthru
          _
        // Predicated region
        $region25: #{tpu_custom_call.1} parent=11 // pred_check
          %p207 = pneg %p131
        $region26: #{tpu_custom_call.1} parent=11 // pred_check_branch
          %209 = sbr.rel (%p207) target = $region28
        $region27: #{tpu_custom_call.1} parent=11 // pred_region
          _
        $region28: #{tpu_custom_call.1} parent=11 // pred_fallthru
          _
      $region12: #{tpu_custom_call.1} parent=5 // pred_fallthru
        _
      %p210 = scmp.lt.s32.totalorder %s21, 2
      // Predicated region
      $region29: #{tpu_custom_call.1} parent=5 // pred_check
        %p211 = pneg %p210
      $region30: #{tpu_custom_call.1} parent=5 // pred_check_branch
        %213 = sbr.rel (%p211) target = $region32
      $region31: #{tpu_custom_call.1} parent=5 // pred_region
        // Predicated region
        $region33: #{tpu_custom_call.1} parent=31 // pred_check
          %p214 = pneg %p41
        $region34: #{tpu_custom_call.1} parent=31 // pred_check_branch
          %216 = sbr.rel (%p214) target = $region36
        $region35: #{tpu_custom_call.1} parent=31 // pred_region
          %s217 = sand.u32 %s31, 1
          %s218 = scalar_lea.sflag [#allocation4], %s217
          %s219 = sand.u32 %s31, 1
          %s220 = smul.addr %s219, 64
          %s221 = scalar_lea.vmem [#allocation3], %s220
          %s222 = smul.u32 8, %s21
          %s224 = ssub.s32 1024, 1024
          %225 = vsyncadd %s218, %s224
          %s226 = smul.addr %s222, 128
          %s227 = scalar_lea.hbm %s0, %s226
          %s228 = sshll.u32 %s221, 4
          %s229 = int_to_ptr.vmem [resolvable:$true] %s228
          %234 = dma.hbm_to_vmem [thread:$0]  %s227, 1024, %s229, %s218, 128, 128, 8
        $region36: #{tpu_custom_call.1} parent=31 // pred_fallthru
          _
      $region32: #{tpu_custom_call.1} parent=5 // pred_fallthru
        _
      %p235 = scmp.le.s32.totalorder 1, %s21
      %p236 = scmp.lt.s32.totalorder %s21, 3
      %p237 = pnand %p235, %p236
      %p238 = pneg %p237
      // Predicated region
      $region37: #{tpu_custom_call.1} parent=5 // pred_check
        _
      $region38: #{tpu_custom_call.1} parent=5 // pred_check_branch
        %240 = sbr.rel (%p237) target = $region40
      $region39: #{tpu_custom_call.1} parent=5 // pred_region
        %s241 = ssub.s32 %s21, 1
        %s242 = sand.u32 %s34, 1
        %s243 = scalar_lea.sflag [#allocation4], %s242
        %s244 = sand.u32 %s34, 1
        %s245 = smul.addr %s244, 64
        %s246 = scalar_lea.vmem [#allocation3], %s245
        // Predicated region
        $region41: #{tpu_custom_call.1} parent=39 // pred_check
          %p247 = pneg %p47
        $region42: #{tpu_custom_call.1} parent=39 // pred_check_branch
          %249 = sbr.rel (%p247) target = $region44
        $region43: #{tpu_custom_call.1} parent=39 // pred_region
          %250 = dma.done %s243, 1024
        $region44: #{tpu_custom_call.1} parent=39 // pred_fallthru
          _
        %s251 = sand.u32 %s34, 1
        %s252 = scalar_lea.sflag [#allocation4], %s251
        %s253 = sand.u32 %s34, 1
        %s254 = smul.addr %s253, 64
        %s255 = scalar_lea.vmem [#allocation3], %s254
        %p256 = pneg %p47
        %p257 = pneg %p44
        %p258 = pneg %p68
        %p259 = pneg %p65
        %p260 = pneg %p89
        %p261 = pneg %p86
        %p262 = pneg %p110
        %p263 = pneg %p107
        %p264 = pneg %p131
        %p265 = pneg %p128
        %p266 = pneg %p157
        %p267 = pneg %p154
        %s268 = sand.u32 %s144, 1
        %s269 = scalar_lea.sflag [#allocation5], %s268
        %s270 = sand.u32 %s144, 1
        %s271 = smul.addr %s270, 8
        %s272 = scalar_lea.vmem [#allocation6], %s271
        %p273 = pneg %p183
        %p274 = pneg %p180
        %p275 = scmp.lt.s32.totalorder %s26, 1
        %s276 = scalar_select %p275, %s26, 1
        %s277 = smul.addr %s276, 8
        %s278 = scalar_lea.vmem %s6, %s277
        %s279 = smul.u32 8, %s26
        %p280 = scmp.lt.s32.totalorder %s26, 1
        %s281 = scalar_select %p280, %s26, 1
        %s282 = smul.addr %s281, 8
        %s283 = scalar_lea.vmem %s6, %s282
        %v284 = vld [vmem:[%s246] sm:$0xff]
        %v285 = vld [vmem:[%s246 + $0x8] sm:$0xff]
        %v286 = vld [vmem:[%s246 + $0x10] sm:$0xff]
        %v287 = vld [vmem:[%s246 + $0x18] sm:$0xff]
        %v288 = vld [vmem:[%s246 + $0x20] sm:$0xff]
        %v289 = vld [vmem:[%s246 + $0x28] sm:$0xff]
        %v290 = vld [vmem:[%s246 + $0x30] sm:$0xff]
        %v291 = vld [vmem:[%s246 + $0x38] sm:$0xff]
        %v292 = vld [vmem:[%s1] sm:$0xff]
        %v293 = vld [vmem:[%s1 + $0x8] sm:$0xff]
        %v294 = vld [vmem:[%s1 + $0x10] sm:$0xff]
        %v295 = vld [vmem:[%s1 + $0x18] sm:$0xff]
        %v296 = vld [vmem:[%s2] sm:$0x1]
        %v298 = vlaneseq
        %v299 = vshrl.u32 %v298, 7
        %v300 = vsub.s32 0, %v299
        %v301 = vrot.slane %v296, %v300
        %vm303 = vcmask 261120
        %v305 = vsel %vm303, %v284, 0
        %v308 = vsel %vm303, %v285, 0
        %v311 = vsel %vm303, %v286, 0
        %v314 = vsel %vm303, %v287, 0
        %v317 = vsel %vm303, %v288, 0
        %v320 = vsel %vm303, %v289, 0
        %v323 = vsel %vm303, %v290, 0
        %v326 = vsel %vm303, %v291, 0
        %328 = vmatprep.subr.mxu0 0.0
        %329 = vmatpush1.msra.mxu0 %v292
        %330 = vmatprep.subr.mxu0 0.0
        %331 = vmatpush1.msra.mxu0 %v293
        %332 = vmatprep.subr.mxu0 0.0
        %333 = vmatpush1.msra.mxu0 %v294
        %334 = vmatprep.subr.mxu0 0.0
        %335 = vmatpush1.msra.mxu0 %v295
        %336 = vmatprep.subr.mxu0 0.0
        %337 = vmatpush1.msra.mxu0 0.0
        %338 = vmatprep.subr.mxu0 0.0
        %339 = vmatpush1.msra.mxu0 0.0
        %340 = vmatprep.subr.mxu0 0.0
        %341 = vmatpush1.msra.mxu0 0.0
        %342 = vmatprep.subr.mxu0 0.0
        %343 = vmatpush1.msra.mxu0 0.0
        %344 = vmatprep.subr.mxu0 0.0
        %345 = vmatpush1.msra.mxu0 0.0
        %346 = vmatprep.subr.mxu0 0.0
        %347 = vmatpush1.msra.mxu0 0.0
        %348 = vmatprep.subr.mxu0 0.0
        %349 = vmatpush1.msra.mxu0 0.0
        %350 = vmatprep.subr.mxu0 0.0
        %351 = vmatpush1.msra.mxu0 0.0
        %352 = vmatprep.subr.mxu0 0.0
        %353 = vmatpush1.msra.mxu0 0.0
        %354 = vmatprep.subr.mxu0 0.0
        %355 = vmatpush1.msra.mxu0 0.0
        %356 = vmatprep.subr.mxu0 0.0
        %357 = vmatpush1.msra.mxu0 0.0
        %358 = vmatprep.subr.mxu0 0.0
        %359 = vmatpush1.msra.mxu0 0.0
        %360 = vmatprep.subr.mxu0 0.0
        %361 = vmatpush1.msra.mxu0 0.0
        %362 = vmatprep.subr.mxu0 0.0
        %363 = vmatpush1.msra.mxu0 0.0
        %364 = vmatprep.subr.mxu0 0.0
        %365 = vmatpush1.msra.mxu0 0.0
        %366 = vmatprep.subr.mxu0 0.0
        %367 = vmatpush1.msra.mxu0 0.0
        %368 = vmatprep.subr.mxu0 0.0
        %369 = vmatpush1.msra.mxu0 0.0
        %370 = vmatprep.subr.mxu0 0.0
        %371 = vmatpush1.msra.mxu0 0.0
        %372 = vmatprep.subr.mxu0 0.0
        %373 = vmatpush1.msra.mxu0 0.0
        %374 = vmatprep.subr.mxu0 0.0
        %375 = vmatpush1.msra.mxu0 0.0
        %376 = vmatprep.subr.mxu0 0.0
        %377 = vmatpush1.msra.mxu0 0.0
        %378 = vmatprep.subr.mxu0 0.0
        %379 = vmatpush1.msra.mxu0 0.0
        %380 = vmatprep.subr.mxu0 0.0
        %381 = vmatpush1.msra.mxu0 0.0
        %382 = vmatprep.subr.mxu0 0.0
        %383 = vmatpush1.msra.mxu0 0.0
        %384 = vmatprep.subr.mxu0 0.0
        %385 = vmatpush1.msra.mxu0 0.0
        %386 = vmatprep.subr.mxu0 0.0
        %387 = vmatpush1.msra.mxu0 0.0
        %388 = vmatprep.subr.mxu0 0.0
        %389 = vmatpush1.msra.mxu0 0.0
        %390 = vmatprep.subr.mxu0 0.0
        %391 = vmatpush1.msra.mxu0 0.0
        %392 = vmatprep.mubr.f32.mxu0 0.0
        %393 = vmatmul.mubr.f32.gmra.mrb[0].mxu0 %v305
        %v394 = vpop.f32.mrb[0].mxu0
        %v395 = vadd.f32 %v301, %v394
        %v396 = vpop.f32.mrb[0].mxu0
        %397 = vmatprep.mubr.f32.mxu0 0.0
        %398 = vmatmul.mubr.f32.gmra.mrb[0].mxu0 %v308
        %v399 = vpop.f32.mrb[0].mxu0
        %v400 = vadd.f32 %v301, %v399
        %v401 = vpop.f32.mrb[0].mxu0
        %402 = vmatprep.mubr.f32.mxu0 0.0
        %403 = vmatmul.mubr.f32.gmra.mrb[0].mxu0 %v311
        %v404 = vpop.f32.mrb[0].mxu0
        %v405 = vadd.f32 %v301, %v404
        %v406 = vpop.f32.mrb[0].mxu0
        %407 = vmatprep.mubr.f32.mxu0 0.0
        %408 = vmatmul.mubr.f32.gmra.mrb[0].mxu0 %v314
        %v409 = vpop.f32.mrb[0].mxu0
        %v410 = vadd.f32 %v301, %v409
        %v411 = vpop.f32.mrb[0].mxu0
        %412 = vmatprep.mubr.f32.mxu0 0.0
        %413 = vmatmul.mubr.f32.gmra.mrb[0].mxu0 %v317
        %v414 = vpop.f32.mrb[0].mxu0
        %v415 = vadd.f32 %v301, %v414
        %v416 = vpop.f32.mrb[0].mxu0
        %417 = vmatprep.mubr.f32.mxu0 0.0
        %418 = vmatmul.mubr.f32.gmra.mrb[0].mxu0 %v320
        %v419 = vpop.f32.mrb[0].mxu0
        %v420 = vadd.f32 %v301, %v419
        %v421 = vpop.f32.mrb[0].mxu0
        %422 = vmatprep.mubr.f32.mxu0 0.0
        %423 = vmatmul.mubr.f32.gmra.mrb[0].mxu0 %v323
        %v424 = vpop.f32.mrb[0].mxu0
        %v425 = vadd.f32 %v301, %v424
        %v426 = vpop.f32.mrb[0].mxu0
        %427 = vmatprep.mubr.f32.mxu0 0.0
        %428 = vmatmul.mubr.f32.gmra.mrb[0].mxu0 %v326
        %v429 = vpop.f32.mrb[0].mxu0
        %v430 = vadd.f32 %v301, %v429
        %v431 = vpop.f32.mrb[0].mxu0
        %432 = vdwg.mxu0
        %v433 = vmax.f32 %v395, 0.0
        %v434 = vmax.f32 %v400, 0.0
        %v435 = vmax.f32 %v405, 0.0
        %v436 = vmax.f32 %v410, 0.0
        %v437 = vmax.f32 %v415, 0.0
        %v438 = vmax.f32 %v420, 0.0
        %v439 = vmax.f32 %v425, 0.0
        %v440 = vmax.f32 %v430, 0.0
        %v441 = vld [vmem:[%s3] sm:$0x1]
        %v443 = vlaneseq
        %v444 = vshrl.u32 %v443, 7
        %v445 = vsub.s32 0, %v444
        %v446 = vrot.slane %v441, %v445
        %v448 = vmul.f32 %v433, %v446
        %v449 = vmul.f32 %v434, %v446
        %v450 = vmul.f32 %v435, %v446
        %v451 = vmul.f32 %v436, %v446
        %v452 = vmul.f32 %v437, %v446
        %v453 = vmul.f32 %v438, %v446
        %v454 = vmul.f32 %v439, %v446
        %v455 = vmul.f32 %v440, %v446
        %vm456 = vcmask 130048
        %v457 = vsel %vm456, %v448, 0.0
        %458 = vadd.xlane.f32.xlu0 %v457
        %v459 = vpop.xlane.xlu0 %458
        %v460 = vsel %vm456, %v449, 0.0
        %461 = vadd.xlane.f32.xlu0 %v460
        %v462 = vpop.xlane.xlu0 %461
        %v463 = vsel %vm456, %v450, 0.0
        %464 = vadd.xlane.f32.xlu0 %v463
        %v465 = vpop.xlane.xlu0 %464
        %v466 = vsel %vm456, %v451, 0.0
        %467 = vadd.xlane.f32.xlu0 %v466
        %v468 = vpop.xlane.xlu0 %467
        %v469 = vsel %vm456, %v452, 0.0
        %470 = vadd.xlane.f32.xlu0 %v469
        %v471 = vpop.xlane.xlu0 %470
        %v472 = vsel %vm456, %v453, 0.0
        %473 = vadd.xlane.f32.xlu0 %v472
        %v474 = vpop.xlane.xlu0 %473
        %v475 = vsel %vm456, %v454, 0.0
        %476 = vadd.xlane.f32.xlu0 %v475
        %v477 = vpop.xlane.xlu0 %476
        %v478 = vsel %vm456, %v455, 0.0
        %479 = vadd.xlane.f32.xlu0 %v478
        %v480 = vpop.xlane.xlu0 %479
        %v481 = vld [vmem:[#allocation2] sm:$0x1]
        %v483 = vlaneseq
        %v484 = vshrl.u32 %v483, 7
        %v485 = vsub.s32 0, %v484
        %v486 = vrot.slane %v481, %v485
        %487 = vset.pattern.permute.xlu0 0
        %488 = vperm.xlu0 %487, %v486
        %v489 = vpop.permute.xlu0 %488
        %v491 = vadd.f32 %v459, %v489
        %v492 = vadd.f32 %v462, %v489
        %v493 = vadd.f32 %v465, %v489
        %v494 = vadd.f32 %v468, %v489
        %v495 = vadd.f32 %v471, %v489
        %v496 = vadd.f32 %v474, %v489
        %v497 = vadd.f32 %v477, %v489
        %v498 = vadd.f32 %v480, %v489
        %v507 = vlaneseq
        %v508 = vand.u32 %v507, 127
        %v509 = vlaneseq
        %v510 = vshrl.u32 %v509, 7
        %v511 = vsub.s32 %v508, %v510
        %v512 = vrot.slane %v491, %v511
        %v513 = vlaneseq
        %v514 = vshrl.u32 %v513, 7
        %v515 = vsub.s32 %v508, %v514
        %v516 = vrot.slane %v492, %v515
        %v517 = vlaneseq
        %v518 = vshrl.u32 %v517, 7
        %v519 = vsub.s32 %v508, %v518
        %v520 = vrot.slane %v493, %v519
        %v521 = vlaneseq
        %v522 = vshrl.u32 %v521, 7
        %v523 = vsub.s32 %v508, %v522
        %v524 = vrot.slane %v494, %v523
        %v525 = vlaneseq
        %v526 = vshrl.u32 %v525, 7
        %v527 = vsub.s32 %v508, %v526
        %v528 = vrot.slane %v495, %v527
        %v529 = vlaneseq
        %v530 = vshrl.u32 %v529, 7
        %v531 = vsub.s32 %v508, %v530
        %v532 = vrot.slane %v496, %v531
        %v533 = vlaneseq
        %v534 = vshrl.u32 %v533, 7
        %v535 = vsub.s32 %v508, %v534
        %v536 = vrot.slane %v497, %v535
        %v537 = vlaneseq
        %v538 = vshrl.u32 %v537, 7
        %v539 = vsub.s32 %v508, %v538
        %v540 = vrot.slane %v498, %v539
        %vm541 = vcmask 1041409
        %v542 = vsel %vm541, %v516, %v512
        %vm543 = vcmask 1042434
        %v544 = vsel %vm543, %v520, %v542
        %vm545 = vcmask 1043459
        %v546 = vsel %vm545, %v524, %v544
        %vm547 = vcmask 1044484
        %v548 = vsel %vm547, %v528, %v546
        %vm549 = vcmask 1045509
        %v550 = vsel %vm549, %v532, %v548
        %vm551 = vcmask 1046534
        %v552 = vsel %vm551, %v536, %v550
        %vm553 = vcmask 1047559
        %v554 = vsel %vm553, %v540, %v552
        %vm556 = vcmask 64512
        %v557 = vsel %vm556, %v554, -inf
        %558 = vmax.xlane.f32.xlu0 %v557
        %v559 = vpop.xlane.xlu0 %558
        %v561 = vlaneseq
        %v562 = vshrl.u32 %v561, 7
        %v563 = vsub.s32 0, %v562
        %v564 = vrot.slane %v559, %v563
        %v565 = vlaneseq
        %v566 = vshrl.u32 %v565, 7
        %v567 = vsub.s32 1, %v566
        %v568 = vrot.slane %v559, %v567
        %v569 = vlaneseq
        %v570 = vshrl.u32 %v569, 7
        %v571 = vsub.s32 2, %v570
        %v572 = vrot.slane %v559, %v571
        %v573 = vlaneseq
        %v574 = vshrl.u32 %v573, 7
        %v575 = vsub.s32 3, %v574
        %v576 = vrot.slane %v559, %v575
        %v577 = vlaneseq
        %v578 = vshrl.u32 %v577, 7
        %v579 = vsub.s32 4, %v578
        %v580 = vrot.slane %v559, %v579
        %v581 = vlaneseq
        %v582 = vshrl.u32 %v581, 7
        %v583 = vsub.s32 5, %v582
        %v584 = vrot.slane %v559, %v583
        %v585 = vlaneseq
        %v586 = vshrl.u32 %v585, 7
        %v587 = vsub.s32 6, %v586
        %v588 = vrot.slane %v559, %v587
        %v589 = vlaneseq
        %v590 = vshrl.u32 %v589, 7
        %v591 = vsub.s32 7, %v590
        %v592 = vrot.slane %v559, %v591
        %v601 = vsub.f32 %v491, %v564
        %v602 = vsub.f32 %v492, %v568
        %v603 = vsub.f32 %v493, %v572
        %v604 = vsub.f32 %v494, %v576
        %v605 = vsub.f32 %v495, %v580
        %v606 = vsub.f32 %v496, %v584
        %v607 = vsub.f32 %v497, %v588
        %v608 = vsub.f32 %v498, %v592
        %v609 = vmul.f32 %v601, 1.442695
        %v610 = vpow.pop %v609
        %v611 = vmul.f32 %v602, 1.442695
        %v612 = vpow.pop %v611
        %v613 = vmul.f32 %v603, 1.442695
        %v614 = vpow.pop %v613
        %v615 = vmul.f32 %v604, 1.442695
        %v616 = vpow.pop %v615
        %v617 = vmul.f32 %v605, 1.442695
        %v618 = vpow.pop %v617
        %v619 = vmul.f32 %v606, 1.442695
        %v620 = vpow.pop %v619
        %v621 = vmul.f32 %v607, 1.442695
        %v622 = vpow.pop %v621
        %v623 = vmul.f32 %v608, 1.442695
        %v624 = vpow.pop %v623
        %633 = vset.pattern.permute.xlu0 0
        %634 = vperm.xlu0 %633, %v610
        %v635 = vpop.permute.xlu0 %634
        %636 = vset.pattern.permute.xlu0 0
        %637 = vperm.xlu0 %636, %v612
        %v638 = vpop.permute.xlu0 %637
        %639 = vset.pattern.permute.xlu0 0
        %640 = vperm.xlu0 %639, %v614
        %v641 = vpop.permute.xlu0 %640
        %642 = vset.pattern.permute.xlu0 0
        %643 = vperm.xlu0 %642, %v616
        %v644 = vpop.permute.xlu0 %643
        %645 = vset.pattern.permute.xlu0 0
        %646 = vperm.xlu0 %645, %v618
        %v647 = vpop.permute.xlu0 %646
        %648 = vset.pattern.permute.xlu0 0
        %649 = vperm.xlu0 %648, %v620
        %v650 = vpop.permute.xlu0 %649
        %651 = vset.pattern.permute.xlu0 0
        %652 = vperm.xlu0 %651, %v622
        %v653 = vpop.permute.xlu0 %652
        %654 = vset.pattern.permute.xlu0 0
        %655 = vperm.xlu0 %654, %v624
        %v656 = vpop.permute.xlu0 %655
        %v657 = vlaneseq
        %v658 = vshrl.u32 %v657, 7
        %v659 = vsub.s32 %v508, %v658
        %v660 = vrot.slane %v635, %v659
        %v661 = vlaneseq
        %v662 = vshrl.u32 %v661, 7
        %v663 = vsub.s32 %v508, %v662
        %v664 = vrot.slane %v638, %v663
        %v665 = vlaneseq
        %v666 = vshrl.u32 %v665, 7
        %v667 = vsub.s32 %v508, %v666
        %v668 = vrot.slane %v641, %v667
        %v669 = vlaneseq
        %v670 = vshrl.u32 %v669, 7
        %v671 = vsub.s32 %v508, %v670
        %v672 = vrot.slane %v644, %v671
        %v673 = vlaneseq
        %v674 = vshrl.u32 %v673, 7
        %v675 = vsub.s32 %v508, %v674
        %v676 = vrot.slane %v647, %v675
        %v677 = vlaneseq
        %v678 = vshrl.u32 %v677, 7
        %v679 = vsub.s32 %v508, %v678
        %v680 = vrot.slane %v650, %v679
        %v681 = vlaneseq
        %v682 = vshrl.u32 %v681, 7
        %v683 = vsub.s32 %v508, %v682
        %v684 = vrot.slane %v653, %v683
        %v685 = vlaneseq
        %v686 = vshrl.u32 %v685, 7
        %v687 = vsub.s32 %v508, %v686
        %v688 = vrot.slane %v656, %v687
        %v689 = vsel %vm541, %v664, %v660
        %v690 = vsel %vm543, %v668, %v689
        %v691 = vsel %vm545, %v672, %v690
        %v692 = vsel %vm547, %v676, %v691
        %v693 = vsel %vm549, %v680, %v692
        %v694 = vsel %vm551, %v684, %v693
        %v695 = vsel %vm553, %v688, %v694
        %v697 = vsel %vm556, %v695, 0.0
        %698 = vadd.xlane.f32.xlu0 %v697
        %v699 = vpop.xlane.xlu0 %698
        %v700 = vrcp.pop %v699
        %v701 = vmul.f32 %v699, %v700
        %v702 = vsub.f32 2.0, %v701
        %v703 = vmul.f32 %v700, %v702
        %v705 = vlaneseq
        %v706 = vshrl.u32 %v705, 7
        %v707 = vsub.s32 0, %v706
        %v708 = vrot.slane %v703, %v707
        %v709 = vlaneseq
        %v710 = vshrl.u32 %v709, 7
        %v711 = vsub.s32 1, %v710
        %v712 = vrot.slane %v703, %v711
        %v713 = vlaneseq
        %v714 = vshrl.u32 %v713, 7
        %v715 = vsub.s32 2, %v714
        %v716 = vrot.slane %v703, %v715
        %v717 = vlaneseq
        %v718 = vshrl.u32 %v717, 7
        %v719 = vsub.s32 3, %v718
        %v720 = vrot.slane %v703, %v719
        %v721 = vlaneseq
        %v722 = vshrl.u32 %v721, 7
        %v723 = vsub.s32 4, %v722
        %v724 = vrot.slane %v703, %v723
        %v725 = vlaneseq
        %v726 = vshrl.u32 %v725, 7
        %v727 = vsub.s32 5, %v726
        %v728 = vrot.slane %v703, %v727
        %v729 = vlaneseq
        %v730 = vshrl.u32 %v729, 7
        %v731 = vsub.s32 6, %v730
        %v732 = vrot.slane %v703, %v731
        %v733 = vlaneseq
        %v734 = vshrl.u32 %v733, 7
        %v735 = vsub.s32 7, %v734
        %v736 = vrot.slane %v703, %v735
        %v745 = vmul.f32 %v610, %v708
        %v746 = vmul.f32 %v612, %v712
        %v747 = vmul.f32 %v614, %v716
        %v748 = vmul.f32 %v616, %v720
        %v749 = vmul.f32 %v618, %v724
        %v750 = vmul.f32 %v620, %v728
        %v751 = vmul.f32 %v622, %v732
        %v752 = vmul.f32 %v624, %v736
        %761 = vset.pattern.permute.xlu0 0
        %762 = vperm.xlu0 %761, %v745
        %v763 = vpop.permute.xlu0 %762
        %764 = vset.pattern.permute.xlu0 0
        %765 = vperm.xlu0 %764, %v746
        %v766 = vpop.permute.xlu0 %765
        %767 = vset.pattern.permute.xlu0 0
        %768 = vperm.xlu0 %767, %v747
        %v769 = vpop.permute.xlu0 %768
        %770 = vset.pattern.permute.xlu0 0
        %771 = vperm.xlu0 %770, %v748
        %v772 = vpop.permute.xlu0 %771
        %773 = vset.pattern.permute.xlu0 0
        %774 = vperm.xlu0 %773, %v749
        %v775 = vpop.permute.xlu0 %774
        %776 = vset.pattern.permute.xlu0 0
        %777 = vperm.xlu0 %776, %v750
        %v778 = vpop.permute.xlu0 %777
        %779 = vset.pattern.permute.xlu0 0
        %780 = vperm.xlu0 %779, %v751
        %v781 = vpop.permute.xlu0 %780
        %782 = vset.pattern.permute.xlu0 0
        %783 = vperm.xlu0 %782, %v752
        %v784 = vpop.permute.xlu0 %783
        %v785 = vlaneseq
        %v786 = vshrl.u32 %v785, 7
        %v787 = vsub.s32 %v508, %v786
        %v788 = vrot.slane %v763, %v787
        %v789 = vlaneseq
        %v790 = vshrl.u32 %v789, 7
        %v791 = vsub.s32 %v508, %v790
        %v792 = vrot.slane %v766, %v791
        %v793 = vlaneseq
        %v794 = vshrl.u32 %v793, 7
        %v795 = vsub.s32 %v508, %v794
        %v796 = vrot.slane %v769, %v795
        %v797 = vlaneseq
        %v798 = vshrl.u32 %v797, 7
        %v799 = vsub.s32 %v508, %v798
        %v800 = vrot.slane %v772, %v799
        %v801 = vlaneseq
        %v802 = vshrl.u32 %v801, 7
        %v803 = vsub.s32 %v508, %v802
        %v804 = vrot.slane %v775, %v803
        %v805 = vlaneseq
        %v806 = vshrl.u32 %v805, 7
        %v807 = vsub.s32 %v508, %v806
        %v808 = vrot.slane %v778, %v807
        %v809 = vlaneseq
        %v810 = vshrl.u32 %v809, 7
        %v811 = vsub.s32 %v508, %v810
        %v812 = vrot.slane %v781, %v811
        %v813 = vlaneseq
        %v814 = vshrl.u32 %v813, 7
        %v815 = vsub.s32 %v508, %v814
        %v816 = vrot.slane %v784, %v815
        %v817 = vsel %vm541, %v792, %v788
        %v818 = vsel %vm543, %v796, %v817
        %v819 = vsel %vm545, %v800, %v818
        %v820 = vsel %vm547, %v804, %v819
        %v821 = vsel %vm549, %v808, %v820
        %v822 = vsel %vm551, %v812, %v821
        %v823 = vsel %vm553, %v816, %v822
        %825 = vst.msk [vmem:[%s283] sm:$0xff] %vm556, %v823
        %v826 = vsel %vm556, %v788, 0
        %828 = vmatprep.subr.mxu0 0.0
        %829 = vmatpush1.msra.mxu0 %v284
        %830 = vmatprep.subr.mxu0 0.0
        %831 = vmatpush1.msra.mxu0 0.0
        %832 = vmatprep.subr.mxu0 0.0
        %833 = vmatpush1.msra.mxu0 0.0
        %834 = vmatprep.subr.mxu0 0.0
        %835 = vmatpush1.msra.mxu0 0.0
        %836 = vmatprep.subr.mxu0 0.0
        %837 = vmatpush1.msra.mxu0 0.0
        %838 = vmatprep.subr.mxu0 0.0
        %839 = vmatpush1.msra.mxu0 0.0
        %840 = vmatprep.subr.mxu0 0.0
        %841 = vmatpush1.msra.mxu0 0.0
        %842 = vmatprep.subr.mxu0 0.0
        %843 = vmatpush1.msra.mxu0 0.0
        %844 = vmatprep.subr.mxu0 0.0
        %845 = vmatpush1.msra.mxu0 0.0
        %846 = vmatprep.subr.mxu0 0.0
        %847 = vmatpush1.msra.mxu0 0.0
        %848 = vmatprep.subr.mxu0 0.0
        %849 = vmatpush1.msra.mxu0 0.0
        %850 = vmatprep.subr.mxu0 0.0
        %851 = vmatpush1.msra.mxu0 0.0
        %852 = vmatprep.subr.mxu0 0.0
        %853 = vmatpush1.msra.mxu0 0.0
        %854 = vmatprep.subr.mxu0 0.0
        %855 = vmatpush1.msra.mxu0 0.0
        %856 = vmatprep.subr.mxu0 0.0
        %857 = vmatpush1.msra.mxu0 0.0
        %858 = vmatprep.subr.mxu0 0.0
        %859 = vmatpush1.msra.mxu0 0.0
        %860 = vmatprep.subr.mxu0 0.0
        %861 = vmatpush1.msra.mxu0 0.0
        %862 = vmatprep.subr.mxu0 0.0
        %863 = vmatpush1.msra.mxu0 0.0
        %864 = vmatprep.subr.mxu0 0.0
        %865 = vmatpush1.msra.mxu0 0.0
        %866 = vmatprep.subr.mxu0 0.0
        %867 = vmatpush1.msra.mxu0 0.0
        %868 = vmatprep.subr.mxu0 0.0
        %869 = vmatpush1.msra.mxu0 0.0
        %870 = vmatprep.subr.mxu0 0.0
        %871 = vmatpush1.msra.mxu0 0.0
        %872 = vmatprep.subr.mxu0 0.0
        %873 = vmatpush1.msra.mxu0 0.0
        %874 = vmatprep.subr.mxu0 0.0
        %875 = vmatpush1.msra.mxu0 0.0
        %876 = vmatprep.subr.mxu0 0.0
        %877 = vmatpush1.msra.mxu0 0.0
        %878 = vmatprep.subr.mxu0 0.0
        %879 = vmatpush1.msra.mxu0 0.0
        %880 = vmatprep.subr.mxu0 0.0
        %881 = vmatpush1.msra.mxu0 0.0
        %882 = vmatprep.subr.mxu0 0.0
        %883 = vmatpush1.msra.mxu0 0.0
        %884 = vmatprep.subr.mxu0 0.0
        %885 = vmatpush1.msra.mxu0 0.0
        %886 = vmatprep.subr.mxu0 0.0
        %887 = vmatpush1.msra.mxu0 0.0
        %888 = vmatprep.subr.mxu0 0.0
        %889 = vmatpush1.msra.mxu0 0.0
        %890 = vmatprep.subr.mxu0 0.0
        %891 = vmatpush1.msra.mxu0 0.0
        %892 = vmatprep.mubr.f32.mxu0 0.0
        %893 = vmatmul.mubr.f32.gmra.mrb[0].mxu0 %v826
        %v894 = vpop.f32.mrb[0].mxu0
        %v895 = vadd.f32 0.0, %v894
        %v896 = vpop.f32.mrb[0].mxu0
        %897 = vdwg.mxu0
        %v898 = vsel %vm556, %v792, 0
        %900 = vmatprep.subr.mxu0 0.0
        %901 = vmatpush1.msra.mxu0 %v285
        %902 = vmatprep.subr.mxu0 0.0
        %903 = vmatpush1.msra.mxu0 0.0
        %904 = vmatprep.subr.mxu0 0.0
        %905 = vmatpush1.msra.mxu0 0.0
        %906 = vmatprep.subr.mxu0 0.0
        %907 = vmatpush1.msra.mxu0 0.0
        %908 = vmatprep.subr.mxu0 0.0
        %909 = vmatpush1.msra.mxu0 0.0
        %910 = vmatprep.subr.mxu0 0.0
        %911 = vmatpush1.msra.mxu0 0.0
        %912 = vmatprep.subr.mxu0 0.0
        %913 = vmatpush1.msra.mxu0 0.0
        %914 = vmatprep.subr.mxu0 0.0
        %915 = vmatpush1.msra.mxu0 0.0
        %916 = vmatprep.subr.mxu0 0.0
        %917 = vmatpush1.msra.mxu0 0.0
        %918 = vmatprep.subr.mxu0 0.0
        %919 = vmatpush1.msra.mxu0 0.0
        %920 = vmatprep.subr.mxu0 0.0
        %921 = vmatpush1.msra.mxu0 0.0
        %922 = vmatprep.subr.mxu0 0.0
        %923 = vmatpush1.msra.mxu0 0.0
        %924 = vmatprep.subr.mxu0 0.0
        %925 = vmatpush1.msra.mxu0 0.0
        %926 = vmatprep.subr.mxu0 0.0
        %927 = vmatpush1.msra.mxu0 0.0
        %928 = vmatprep.subr.mxu0 0.0
        %929 = vmatpush1.msra.mxu0 0.0
        %930 = vmatprep.subr.mxu0 0.0
        %931 = vmatpush1.msra.mxu0 0.0
        %932 = vmatprep.subr.mxu0 0.0
        %933 = vmatpush1.msra.mxu0 0.0
        %934 = vmatprep.subr.mxu0 0.0
        %935 = vmatpush1.msra.mxu0 0.0
        %936 = vmatprep.subr.mxu0 0.0
        %937 = vmatpush1.msra.mxu0 0.0
        %938 = vmatprep.subr.mxu0 0.0
        %939 = vmatpush1.msra.mxu0 0.0
        %940 = vmatprep.subr.mxu0 0.0
        %941 = vmatpush1.msra.mxu0 0.0
        %942 = vmatprep.subr.mxu0 0.0
        %943 = vmatpush1.msra.mxu0 0.0
        %944 = vmatprep.subr.mxu0 0.0
        %945 = vmatpush1.msra.mxu0 0.0
        %946 = vmatprep.subr.mxu0 0.0
        %947 = vmatpush1.msra.mxu0 0.0
        %948 = vmatprep.subr.mxu0 0.0
        %949 = vmatpush1.msra.mxu0 0.0
        %950 = vmatprep.subr.mxu0 0.0
        %951 = vmatpush1.msra.mxu0 0.0
        %952 = vmatprep.subr.mxu0 0.0
        %953 = vmatpush1.msra.mxu0 0.0
        %954 = vmatprep.subr.mxu0 0.0
        %955 = vmatpush1.msra.mxu0 0.0
        %956 = vmatprep.subr.mxu0 0.0
        %957 = vmatpush1.msra.mxu0 0.0
        %958 = vmatprep.subr.mxu0 0.0
        %959 = vmatpush1.msra.mxu0 0.0
        %960 = vmatprep.subr.mxu0 0.0
        %961 = vmatpush1.msra.mxu0 0.0
        %962 = vmatprep.subr.mxu0 0.0
        %963 = vmatpush1.msra.mxu0 0.0
        %964 = vmatprep.mubr.f32.mxu0 0.0
        %965 = vmatmul.mubr.f32.gmra.mrb[0].mxu0 %v898
        %v966 = vpop.f32.mrb[0].mxu0
        %v967 = vadd.f32 0.0, %v966
        %v968 = vpop.f32.mrb[0].mxu0
        %969 = vdwg.mxu0
        %v970 = vsel %vm556, %v796, 0
        %972 = vmatprep.subr.mxu0 0.0
        %973 = vmatpush1.msra.mxu0 %v286
        %974 = vmatprep.subr.mxu0 0.0
        %975 = vmatpush1.msra.mxu0 0.0
        %976 = vmatprep.subr.mxu0 0.0
        %977 = vmatpush1.msra.mxu0 0.0
        %978 = vmatprep.subr.mxu0 0.0
        %979 = vmatpush1.msra.mxu0 0.0
        %980 = vmatprep.subr.mxu0 0.0
        %981 = vmatpush1.msra.mxu0 0.0
        %982 = vmatprep.subr.mxu0 0.0
        %983 = vmatpush1.msra.mxu0 0.0
        %984 = vmatprep.subr.mxu0 0.0
        %985 = vmatpush1.msra.mxu0 0.0
        %986 = vmatprep.subr.mxu0 0.0
        %987 = vmatpush1.msra.mxu0 0.0
        %988 = vmatprep.subr.mxu0 0.0
        %989 = vmatpush1.msra.mxu0 0.0
        %990 = vmatprep.subr.mxu0 0.0
        %991 = vmatpush1.msra.mxu0 0.0
        %992 = vmatprep.subr.mxu0 0.0
        %993 = vmatpush1.msra.mxu0 0.0
        %994 = vmatprep.subr.mxu0 0.0
        %995 = vmatpush1.msra.mxu0 0.0
        %996 = vmatprep.subr.mxu0 0.0
        %997 = vmatpush1.msra.mxu0 0.0
        %998 = vmatprep.subr.mxu0 0.0
        %999 = vmatpush1.msra.mxu0 0.0
        %1000 = vmatprep.subr.mxu0 0.0
        %1001 = vmatpush1.msra.mxu0 0.0
        %1002 = vmatprep.subr.mxu0 0.0
        %1003 = vmatpush1.msra.mxu0 0.0
        %1004 = vmatprep.subr.mxu0 0.0
        %1005 = vmatpush1.msra.mxu0 0.0
        %1006 = vmatprep.subr.mxu0 0.0
        %1007 = vmatpush1.msra.mxu0 0.0
        %1008 = vmatprep.subr.mxu0 0.0
        %1009 = vmatpush1.msra.mxu0 0.0
        %1010 = vmatprep.subr.mxu0 0.0
        %1011 = vmatpush1.msra.mxu0 0.0
        %1012 = vmatprep.subr.mxu0 0.0
        %1013 = vmatpush1.msra.mxu0 0.0
        %1014 = vmatprep.subr.mxu0 0.0
        %1015 = vmatpush1.msra.mxu0 0.0
        %1016 = vmatprep.subr.mxu0 0.0
        %1017 = vmatpush1.msra.mxu0 0.0
        %1018 = vmatprep.subr.mxu0 0.0
        %1019 = vmatpush1.msra.mxu0 0.0
        %1020 = vmatprep.subr.mxu0 0.0
        %1021 = vmatpush1.msra.mxu0 0.0
        %1022 = vmatprep.subr.mxu0 0.0
        %1023 = vmatpush1.msra.mxu0 0.0
        %1024 = vmatprep.subr.mxu0 0.0
        %1025 = vmatpush1.msra.mxu0 0.0
        %1026 = vmatprep.subr.mxu0 0.0
        %1027 = vmatpush1.msra.mxu0 0.0
        %1028 = vmatprep.subr.mxu0 0.0
        %1029 = vmatpush1.msra.mxu0 0.0
        %1030 = vmatprep.subr.mxu0 0.0
        %1031 = vmatpush1.msra.mxu0 0.0
        %1032 = vmatprep.subr.mxu0 0.0
        %1033 = vmatpush1.msra.mxu0 0.0
        %1034 = vmatprep.subr.mxu0 0.0
        %1035 = vmatpush1.msra.mxu0 0.0
        %1036 = vmatprep.mubr.f32.mxu0 0.0
        %1037 = vmatmul.mubr.f32.gmra.mrb[0].mxu0 %v970
        %v1038 = vpop.f32.mrb[0].mxu0
        %v1039 = vadd.f32 0.0, %v1038
        %v1040 = vpop.f32.mrb[0].mxu0
        %1041 = vdwg.mxu0
        %v1042 = vsel %vm556, %v800, 0
        %1044 = vmatprep.subr.mxu0 0.0
        %1045 = vmatpush1.msra.mxu0 %v287
        %1046 = vmatprep.subr.mxu0 0.0
        %1047 = vmatpush1.msra.mxu0 0.0
        %1048 = vmatprep.subr.mxu0 0.0
        %1049 = vmatpush1.msra.mxu0 0.0
        %1050 = vmatprep.subr.mxu0 0.0
        %1051 = vmatpush1.msra.mxu0 0.0
        %1052 = vmatprep.subr.mxu0 0.0
        %1053 = vmatpush1.msra.mxu0 0.0
        %1054 = vmatprep.subr.mxu0 0.0
        %1055 = vmatpush1.msra.mxu0 0.0
        %1056 = vmatprep.subr.mxu0 0.0
        %1057 = vmatpush1.msra.mxu0 0.0
        %1058 = vmatprep.subr.mxu0 0.0
        %1059 = vmatpush1.msra.mxu0 0.0
        %1060 = vmatprep.subr.mxu0 0.0
        %1061 = vmatpush1.msra.mxu0 0.0
        %1062 = vmatprep.subr.mxu0 0.0
        %1063 = vmatpush1.msra.mxu0 0.0
        %1064 = vmatprep.subr.mxu0 0.0
        %1065 = vmatpush1.msra.mxu0 0.0
        %1066 = vmatprep.subr.mxu0 0.0
        %1067 = vmatpush1.msra.mxu0 0.0
        %1068 = vmatprep.subr.mxu0 0.0
        %1069 = vmatpush1.msra.mxu0 0.0
        %1070 = vmatprep.subr.mxu0 0.0
        %1071 = vmatpush1.msra.mxu0 0.0
        %1072 = vmatprep.subr.mxu0 0.0
        %1073 = vmatpush1.msra.mxu0 0.0
        %1074 = vmatprep.subr.mxu0 0.0
        %1075 = vmatpush1.msra.mxu0 0.0
        %1076 = vmatprep.subr.mxu0 0.0
        %1077 = vmatpush1.msra.mxu0 0.0
        %1078 = vmatprep.subr.mxu0 0.0
        %1079 = vmatpush1.msra.mxu0 0.0
        %1080 = vmatprep.subr.mxu0 0.0
        %1081 = vmatpush1.msra.mxu0 0.0
        %1082 = vmatprep.subr.mxu0 0.0
        %1083 = vmatpush1.msra.mxu0 0.0
        %1084 = vmatprep.subr.mxu0 0.0
        %1085 = vmatpush1.msra.mxu0 0.0
        %1086 = vmatprep.subr.mxu0 0.0
        %1087 = vmatpush1.msra.mxu0 0.0
        %1088 = vmatprep.subr.mxu0 0.0
        %1089 = vmatpush1.msra.mxu0 0.0
        %1090 = vmatprep.subr.mxu0 0.0
        %1091 = vmatpush1.msra.mxu0 0.0
        %1092 = vmatprep.subr.mxu0 0.0
        %1093 = vmatpush1.msra.mxu0 0.0
        %1094 = vmatprep.subr.mxu0 0.0
        %1095 = vmatpush1.msra.mxu0 0.0
        %1096 = vmatprep.subr.mxu0 0.0
        %1097 = vmatpush1.msra.mxu0 0.0
        %1098 = vmatprep.subr.mxu0 0.0
        %1099 = vmatpush1.msra.mxu0 0.0
        %1100 = vmatprep.subr.mxu0 0.0
        %1101 = vmatpush1.msra.mxu0 0.0
        %1102 = vmatprep.subr.mxu0 0.0
        %1103 = vmatpush1.msra.mxu0 0.0
        %1104 = vmatprep.subr.mxu0 0.0
        %1105 = vmatpush1.msra.mxu0 0.0
        %1106 = vmatprep.subr.mxu0 0.0
        %1107 = vmatpush1.msra.mxu0 0.0
        %1108 = vmatprep.mubr.f32.mxu0 0.0
        %1109 = vmatmul.mubr.f32.gmra.mrb[0].mxu0 %v1042
        %v1110 = vpop.f32.mrb[0].mxu0
        %v1111 = vadd.f32 0.0, %v1110
        %v1112 = vpop.f32.mrb[0].mxu0
        %1113 = vdwg.mxu0
        %v1114 = vsel %vm556, %v804, 0
        %1116 = vmatprep.subr.mxu0 0.0
        %1117 = vmatpush1.msra.mxu0 %v288
        %1118 = vmatprep.subr.mxu0 0.0
        %1119 = vmatpush1.msra.mxu0 0.0
        %1120 = vmatprep.subr.mxu0 0.0
        %1121 = vmatpush1.msra.mxu0 0.0
        %1122 = vmatprep.subr.mxu0 0.0
        %1123 = vmatpush1.msra.mxu0 0.0
        %1124 = vmatprep.subr.mxu0 0.0
        %1125 = vmatpush1.msra.mxu0 0.0
        %1126 = vmatprep.subr.mxu0 0.0
        %1127 = vmatpush1.msra.mxu0 0.0
        %1128 = vmatprep.subr.mxu0 0.0
        %1129 = vmatpush1.msra.mxu0 0.0
        %1130 = vmatprep.subr.mxu0 0.0
        %1131 = vmatpush1.msra.mxu0 0.0
        %1132 = vmatprep.subr.mxu0 0.0
        %1133 = vmatpush1.msra.mxu0 0.0
        %1134 = vmatprep.subr.mxu0 0.0
        %1135 = vmatpush1.msra.mxu0 0.0
        %1136 = vmatprep.subr.mxu0 0.0
        %1137 = vmatpush1.msra.mxu0 0.0
        %1138 = vmatprep.subr.mxu0 0.0
        %1139 = vmatpush1.msra.mxu0 0.0
        %1140 = vmatprep.subr.mxu0 0.0
        %1141 = vmatpush1.msra.mxu0 0.0
        %1142 = vmatprep.subr.mxu0 0.0
        %1143 = vmatpush1.msra.mxu0 0.0
        %1144 = vmatprep.subr.mxu0 0.0
        %1145 = vmatpush1.msra.mxu0 0.0
        %1146 = vmatprep.subr.mxu0 0.0
        %1147 = vmatpush1.msra.mxu0 0.0
        %1148 = vmatprep.subr.mxu0 0.0
        %1149 = vmatpush1.msra.mxu0 0.0
        %1150 = vmatprep.subr.mxu0 0.0
        %1151 = vmatpush1.msra.mxu0 0.0
        %1152 = vmatprep.subr.mxu0 0.0
        %1153 = vmatpush1.msra.mxu0 0.0
        %1154 = vmatprep.subr.mxu0 0.0
        %1155 = vmatpush1.msra.mxu0 0.0
        %1156 = vmatprep.subr.mxu0 0.0
        %1157 = vmatpush1.msra.mxu0 0.0
        %1158 = vmatprep.subr.mxu0 0.0
        %1159 = vmatpush1.msra.mxu0 0.0
        %1160 = vmatprep.subr.mxu0 0.0
        %1161 = vmatpush1.msra.mxu0 0.0
        %1162 = vmatprep.subr.mxu0 0.0
        %1163 = vmatpush1.msra.mxu0 0.0
        %1164 = vmatprep.subr.mxu0 0.0
        %1165 = vmatpush1.msra.mxu0 0.0
        %1166 = vmatprep.subr.mxu0 0.0
        %1167 = vmatpush1.msra.mxu0 0.0
        %1168 = vmatprep.subr.mxu0 0.0
        %1169 = vmatpush1.msra.mxu0 0.0
        %1170 = vmatprep.subr.mxu0 0.0
        %1171 = vmatpush1.msra.mxu0 0.0
        %1172 = vmatprep.subr.mxu0 0.0
        %1173 = vmatpush1.msra.mxu0 0.0
        %1174 = vmatprep.subr.mxu0 0.0
        %1175 = vmatpush1.msra.mxu0 0.0
        %1176 = vmatprep.subr.mxu0 0.0
        %1177 = vmatpush1.msra.mxu0 0.0
        %1178 = vmatprep.subr.mxu0 0.0
        %1179 = vmatpush1.msra.mxu0 0.0
        %1180 = vmatprep.mubr.f32.mxu0 0.0
        %1181 = vmatmul.mubr.f32.gmra.mrb[0].mxu0 %v1114
        %v1182 = vpop.f32.mrb[0].mxu0
        %v1183 = vadd.f32 0.0, %v1182
        %v1184 = vpop.f32.mrb[0].mxu0
        %1185 = vdwg.mxu0
        %v1186 = vsel %vm556, %v808, 0
        %1188 = vmatprep.subr.mxu0 0.0
        %1189 = vmatpush1.msra.mxu0 %v289
        %1190 = vmatprep.subr.mxu0 0.0
        %1191 = vmatpush1.msra.mxu0 0.0
        %1192 = vmatprep.subr.mxu0 0.0
        %1193 = vmatpush1.msra.mxu0 0.0
        %1194 = vmatprep.subr.mxu0 0.0
        %1195 = vmatpush1.msra.mxu0 0.0
        %1196 = vmatprep.subr.mxu0 0.0
        %1197 = vmatpush1.msra.mxu0 0.0
        %1198 = vmatprep.subr.mxu0 0.0
        %1199 = vmatpush1.msra.mxu0 0.0
        %1200 = vmatprep.subr.mxu0 0.0
        %1201 = vmatpush1.msra.mxu0 0.0
        %1202 = vmatprep.subr.mxu0 0.0
        %1203 = vmatpush1.msra.mxu0 0.0
        %1204 = vmatprep.subr.mxu0 0.0
        %1205 = vmatpush1.msra.mxu0 0.0
        %1206 = vmatprep.subr.mxu0 0.0
        %1207 = vmatpush1.msra.mxu0 0.0
        %1208 = vmatprep.subr.mxu0 0.0
        %1209 = vmatpush1.msra.mxu0 0.0
        %1210 = vmatprep.subr.mxu0 0.0
        %1211 = vmatpush1.msra.mxu0 0.0
        %1212 = vmatprep.subr.mxu0 0.0
        %1213 = vmatpush1.msra.mxu0 0.0
        %1214 = vmatprep.subr.mxu0 0.0
        %1215 = vmatpush1.msra.mxu0 0.0
        %1216 = vmatprep.subr.mxu0 0.0
        %1217 = vmatpush1.msra.mxu0 0.0
        %1218 = vmatprep.subr.mxu0 0.0
        %1219 = vmatpush1.msra.mxu0 0.0
        %1220 = vmatprep.subr.mxu0 0.0
        %1221 = vmatpush1.msra.mxu0 0.0
        %1222 = vmatprep.subr.mxu0 0.0
        %1223 = vmatpush1.msra.mxu0 0.0
        %1224 = vmatprep.subr.mxu0 0.0
        %1225 = vmatpush1.msra.mxu0 0.0
        %1226 = vmatprep.subr.mxu0 0.0
        %1227 = vmatpush1.msra.mxu0 0.0
        %1228 = vmatprep.subr.mxu0 0.0
        %1229 = vmatpush1.msra.mxu0 0.0
        %1230 = vmatprep.subr.mxu0 0.0
        %1231 = vmatpush1.msra.mxu0 0.0
        %1232 = vmatprep.subr.mxu0 0.0
        %1233 = vmatpush1.msra.mxu0 0.0
        %1234 = vmatprep.subr.mxu0 0.0
        %1235 = vmatpush1.msra.mxu0 0.0
        %1236 = vmatprep.subr.mxu0 0.0
        %1237 = vmatpush1.msra.mxu0 0.0
        %1238 = vmatprep.subr.mxu0 0.0
        %1239 = vmatpush1.msra.mxu0 0.0
        %1240 = vmatprep.subr.mxu0 0.0
        %1241 = vmatpush1.msra.mxu0 0.0
        %1242 = vmatprep.subr.mxu0 0.0
        %1243 = vmatpush1.msra.mxu0 0.0
        %1244 = vmatprep.subr.mxu0 0.0
        %1245 = vmatpush1.msra.mxu0 0.0
        %1246 = vmatprep.subr.mxu0 0.0
        %1247 = vmatpush1.msra.mxu0 0.0
        %1248 = vmatprep.subr.mxu0 0.0
        %1249 = vmatpush1.msra.mxu0 0.0
        %1250 = vmatprep.subr.mxu0 0.0
        %1251 = vmatpush1.msra.mxu0 0.0
        %1252 = vmatprep.mubr.f32.mxu0 0.0
        %1253 = vmatmul.mubr.f32.gmra.mrb[0].mxu0 %v1186
        %v1254 = vpop.f32.mrb[0].mxu0
        %v1255 = vadd.f32 0.0, %v1254
        %v1256 = vpop.f32.mrb[0].mxu0
        %1257 = vdwg.mxu0
        %v1258 = vsel %vm556, %v812, 0
        %1260 = vmatprep.subr.mxu0 0.0
        %1261 = vmatpush1.msra.mxu0 %v290
        %1262 = vmatprep.subr.mxu0 0.0
        %1263 = vmatpush1.msra.mxu0 0.0
        %1264 = vmatprep.subr.mxu0 0.0
        %1265 = vmatpush1.msra.mxu0 0.0
        %1266 = vmatprep.subr.mxu0 0.0
        %1267 = vmatpush1.msra.mxu0 0.0
        %1268 = vmatprep.subr.mxu0 0.0
        %1269 = vmatpush1.msra.mxu0 0.0
        %1270 = vmatprep.subr.mxu0 0.0
        %1271 = vmatpush1.msra.mxu0 0.0
        %1272 = vmatprep.subr.mxu0 0.0
        %1273 = vmatpush1.msra.mxu0 0.0
        %1274 = vmatprep.subr.mxu0 0.0
        %1275 = vmatpush1.msra.mxu0 0.0
        %1276 = vmatprep.subr.mxu0 0.0
        %1277 = vmatpush1.msra.mxu0 0.0
        %1278 = vmatprep.subr.mxu0 0.0
        %1279 = vmatpush1.msra.mxu0 0.0
        %1280 = vmatprep.subr.mxu0 0.0
        %1281 = vmatpush1.msra.mxu0 0.0
        %1282 = vmatprep.subr.mxu0 0.0
        %1283 = vmatpush1.msra.mxu0 0.0
        %1284 = vmatprep.subr.mxu0 0.0
        %1285 = vmatpush1.msra.mxu0 0.0
        %1286 = vmatprep.subr.mxu0 0.0
        %1287 = vmatpush1.msra.mxu0 0.0
        %1288 = vmatprep.subr.mxu0 0.0
        %1289 = vmatpush1.msra.mxu0 0.0
        %1290 = vmatprep.subr.mxu0 0.0
        %1291 = vmatpush1.msra.mxu0 0.0
        %1292 = vmatprep.subr.mxu0 0.0
        %1293 = vmatpush1.msra.mxu0 0.0
        %1294 = vmatprep.subr.mxu0 0.0
        %1295 = vmatpush1.msra.mxu0 0.0
        %1296 = vmatprep.subr.mxu0 0.0
        %1297 = vmatpush1.msra.mxu0 0.0
        %1298 = vmatprep.subr.mxu0 0.0
        %1299 = vmatpush1.msra.mxu0 0.0
        %1300 = vmatprep.subr.mxu0 0.0
        %1301 = vmatpush1.msra.mxu0 0.0
        %1302 = vmatprep.subr.mxu0 0.0
        %1303 = vmatpush1.msra.mxu0 0.0
        %1304 = vmatprep.subr.mxu0 0.0
        %1305 = vmatpush1.msra.mxu0 0.0
        %1306 = vmatprep.subr.mxu0 0.0
        %1307 = vmatpush1.msra.mxu0 0.0
        %1308 = vmatprep.subr.mxu0 0.0
        %1309 = vmatpush1.msra.mxu0 0.0
        %1310 = vmatprep.subr.mxu0 0.0
        %1311 = vmatpush1.msra.mxu0 0.0
        %1312 = vmatprep.subr.mxu0 0.0
        %1313 = vmatpush1.msra.mxu0 0.0
        %1314 = vmatprep.subr.mxu0 0.0
        %1315 = vmatpush1.msra.mxu0 0.0
        %1316 = vmatprep.subr.mxu0 0.0
        %1317 = vmatpush1.msra.mxu0 0.0
        %1318 = vmatprep.subr.mxu0 0.0
        %1319 = vmatpush1.msra.mxu0 0.0
        %1320 = vmatprep.subr.mxu0 0.0
        %1321 = vmatpush1.msra.mxu0 0.0
        %1322 = vmatprep.subr.mxu0 0.0
        %1323 = vmatpush1.msra.mxu0 0.0
        %1324 = vmatprep.mubr.f32.mxu0 0.0
        %1325 = vmatmul.mubr.f32.gmra.mrb[0].mxu0 %v1258
        %v1326 = vpop.f32.mrb[0].mxu0
        %v1327 = vadd.f32 0.0, %v1326
        %v1328 = vpop.f32.mrb[0].mxu0
        %1329 = vdwg.mxu0
        %v1330 = vsel %vm556, %v816, 0
        %1332 = vmatprep.subr.mxu0 0.0
        %1333 = vmatpush1.msra.mxu0 %v291
        %1334 = vmatprep.subr.mxu0 0.0
        %1335 = vmatpush1.msra.mxu0 0.0
        %1336 = vmatprep.subr.mxu0 0.0
        %1337 = vmatpush1.msra.mxu0 0.0
        %1338 = vmatprep.subr.mxu0 0.0
        %1339 = vmatpush1.msra.mxu0 0.0
        %1340 = vmatprep.subr.mxu0 0.0
        %1341 = vmatpush1.msra.mxu0 0.0
        %1342 = vmatprep.subr.mxu0 0.0
        %1343 = vmatpush1.msra.mxu0 0.0
        %1344 = vmatprep.subr.mxu0 0.0
        %1345 = vmatpush1.msra.mxu0 0.0
        %1346 = vmatprep.subr.mxu0 0.0
        %1347 = vmatpush1.msra.mxu0 0.0
        %1348 = vmatprep.subr.mxu0 0.0
        %1349 = vmatpush1.msra.mxu0 0.0
        %1350 = vmatprep.subr.mxu0 0.0
        %1351 = vmatpush1.msra.mxu0 0.0
        %1352 = vmatprep.subr.mxu0 0.0
        %1353 = vmatpush1.msra.mxu0 0.0
        %1354 = vmatprep.subr.mxu0 0.0
        %1355 = vmatpush1.msra.mxu0 0.0
        %1356 = vmatprep.subr.mxu0 0.0
        %1357 = vmatpush1.msra.mxu0 0.0
        %1358 = vmatprep.subr.mxu0 0.0
        %1359 = vmatpush1.msra.mxu0 0.0
        %1360 = vmatprep.subr.mxu0 0.0
        %1361 = vmatpush1.msra.mxu0 0.0
        %1362 = vmatprep.subr.mxu0 0.0
        %1363 = vmatpush1.msra.mxu0 0.0
        %1364 = vmatprep.subr.mxu0 0.0
        %1365 = vmatpush1.msra.mxu0 0.0
        %1366 = vmatprep.subr.mxu0 0.0
        %1367 = vmatpush1.msra.mxu0 0.0
        %1368 = vmatprep.subr.mxu0 0.0
        %1369 = vmatpush1.msra.mxu0 0.0
        %1370 = vmatprep.subr.mxu0 0.0
        %1371 = vmatpush1.msra.mxu0 0.0
        %1372 = vmatprep.subr.mxu0 0.0
        %1373 = vmatpush1.msra.mxu0 0.0
        %1374 = vmatprep.subr.mxu0 0.0
        %1375 = vmatpush1.msra.mxu0 0.0
        %1376 = vmatprep.subr.mxu0 0.0
        %1377 = vmatpush1.msra.mxu0 0.0
        %1378 = vmatprep.subr.mxu0 0.0
        %1379 = vmatpush1.msra.mxu0 0.0
        %1380 = vmatprep.subr.mxu0 0.0
        %1381 = vmatpush1.msra.mxu0 0.0
        %1382 = vmatprep.subr.mxu0 0.0
        %1383 = vmatpush1.msra.mxu0 0.0
        %1384 = vmatprep.subr.mxu0 0.0
        %1385 = vmatpush1.msra.mxu0 0.0
        %1386 = vmatprep.subr.mxu0 0.0
        %1387 = vmatpush1.msra.mxu0 0.0
        %1388 = vmatprep.subr.mxu0 0.0
        %1389 = vmatpush1.msra.mxu0 0.0
        %1390 = vmatprep.subr.mxu0 0.0
        %1391 = vmatpush1.msra.mxu0 0.0
        %1392 = vmatprep.subr.mxu0 0.0
        %1393 = vmatpush1.msra.mxu0 0.0
        %1394 = vmatprep.subr.mxu0 0.0
        %1395 = vmatpush1.msra.mxu0 0.0
        %1396 = vmatprep.mubr.f32.mxu0 0.0
        %1397 = vmatmul.mubr.f32.gmra.mrb[0].mxu0 %v1330
        %v1398 = vpop.f32.mrb[0].mxu0
        %v1399 = vadd.f32 0.0, %v1398
        %v1400 = vpop.f32.mrb[0].mxu0
        %1401 = vdwg.mxu0
        %v1410 = vrot.slane %v967, 7
        %v1411 = vsel %vm541, %v1410, %v895
        %v1412 = vrot.slane %v1039, 6
        %v1413 = vsel %vm543, %v1412, %v1411
        %v1414 = vrot.slane %v1111, 5
        %v1415 = vsel %vm545, %v1414, %v1413
        %v1416 = vrot.slane %v1183, 4
        %v1417 = vsel %vm547, %v1416, %v1415
        %v1418 = vrot.slane %v1255, 3
        %v1419 = vsel %vm549, %v1418, %v1417
        %v1420 = vrot.slane %v1327, 2
        %v1421 = vsel %vm551, %v1420, %v1419
        %v1422 = vrot.slane %v1399, 1
        %v1423 = vsel %vm553, %v1422, %v1421
        %1425 = vst.msk [vmem:[%s272] sm:$0xff] %vm303, %v1423
        %s1426 = sand.u32 %s144, 1
        %s1427 = scalar_lea.sflag [#allocation5], %s1426
        %s1428 = sand.u32 %s144, 1
        %s1429 = smul.addr %s1428, 8
        %s1430 = scalar_lea.vmem [#allocation6], %s1429
        %p1431 = scmp.lt.s32.totalorder %s26, 1
        %s1432 = scalar_select %p1431, %s26, 1
        %s1433 = smul.addr %s1432, 8
        %s1434 = scalar_lea.vmem %s6, %s1433
        // Predicated region
        $region45: #{tpu_custom_call.1} parent=39 // pred_check
          %p1435 = pneg %p154
        $region46: #{tpu_custom_call.1} parent=39 // pred_check_branch
          %1437 = sbr.rel (%p1435) target = $region48
        $region47: #{tpu_custom_call.1} parent=39 // pred_region
          %s1439 = ssub.s32 128, 128
          %1440 = vsyncadd %s1427, %s1439
          %s1441 = smul.addr %s26, 128
          %s1442 = scalar_lea.hbm %s5, %s1441
          %s1444 = sshll.u32 %s1430, 4
          %s1445 = int_to_ptr.vmem [resolvable:$true] %s1444
          %1447 = dma.vmem_to_hbm [thread:$0]  %s1445, 128, %s1442, %s1427
        $region48: #{tpu_custom_call.1} parent=39 // pred_fallthru
          _
        // Predicated region
        $region49: #{tpu_custom_call.1} parent=39 // pred_check
          %p1448 = pneg %p180
        $region50: #{tpu_custom_call.1} parent=39 // pred_check_branch
          %1450 = sbr.rel (%p1448) target = $region52
        $region51: #{tpu_custom_call.1} parent=39 // pred_region
          _
        $region52: #{tpu_custom_call.1} parent=39 // pred_fallthru
          _
      $region40: #{tpu_custom_call.1} parent=5 // pred_fallthru
        _
      %p1451 = scmp.le.s32.totalorder 2, %s21
      // Predicated region
      $region53: #{tpu_custom_call.1} parent=5 // pred_check
        %p1452 = pneg %p1451
      $region54: #{tpu_custom_call.1} parent=5 // pred_check_branch
        %1454 = sbr.rel (%p1452) target = $region56
      $region55: #{tpu_custom_call.1} parent=5 // pred_region
        %s1455 = ssub.s32 %s21, 2
        // Predicated region
        $region57: #{tpu_custom_call.1} parent=55 // pred_check
          %p1456 = pneg %p160
        $region58: #{tpu_custom_call.1} parent=55 // pred_check_branch
          %1458 = sbr.rel (%p1456) target = $region60
        $region59: #{tpu_custom_call.1} parent=55 // pred_region
          %s1459 = sand.u32 %s145, 1
          %s1460 = scalar_lea.sflag [#allocation5], %s1459
          %s1461 = sand.u32 %s145, 1
          %s1462 = smul.addr %s1461, 8
          %s1463 = scalar_lea.vmem [#allocation6], %s1462
          %1464 = dma.done %s1460, 128
        $region60: #{tpu_custom_call.1} parent=55 // pred_fallthru
          _
        // Predicated region
        $region61: #{tpu_custom_call.1} parent=55 // pred_check
          %p1465 = pneg %p186
        $region62: #{tpu_custom_call.1} parent=55 // pred_check_branch
          %1467 = sbr.rel (%p1465) target = $region64
        $region63: #{tpu_custom_call.1} parent=55 // pred_region
          %p1468 = scmp.lt.s32.totalorder %s27, 1
          %s1469 = scalar_select %p1468, %s27, 1
          %s1470 = smul.addr %s1469, 8
          %s1471 = scalar_lea.vmem %s6, %s1470
        $region64: #{tpu_custom_call.1} parent=55 // pred_fallthru
          _
      $region56: #{tpu_custom_call.1} parent=5 // pred_fallthru
        _
    $region6: #{tpu_custom_call.1} parent=1 // loop_footer
      %s25 = sadd.s32 1, %s21
    $region7: #{tpu_custom_call.1} parent=1 // loop_footer_branch
      %20 = sbr.rel target = $region3
    $region8: #{tpu_custom_call.1} parent=1 // loop_exit
      _
    %1472 = vsyncpa [#allocation4], 1
    %s1473 = scalar_lea.sflag [#allocation4], 1
    %1474 = vsyncpa %s1473, 1
    %1475 = vsyncpa [#allocation5], 1
    %s1476 = scalar_lea.sflag [#allocation5], 1
    %1477 = vsyncpa %s1476, 1

</llo_original>
